<compile_context>
chip_gen: v7x
topology: tpu7x:2x2x1
jax: 0.10.0
libtpu: 0.0.40
codegen_flags: <defaults>
</compile_context>

<pallas_src>
import jax
import jax.numpy as jnp
from jax.experimental import pallas as pl
from jax.experimental.pallas import tpu as pltpu

# ---- constants (from Building.__init__) -------------------------------------
BETA_1_PRIME = 1.0 / 133.0 * 0.1
BETA_1 = BETA_1_PRIME * 20.0
BETA_2 = BETA_1_PRIME
C_IN = (400.0 - 600.0) / 200.0        # = -1.0
G1 = 0.0005
G2 = 0.02 * 10.0                      # = 0.2

# Pre-folded constants (fewer VALU ops in-kernel).
G1_HALF = G1 * 0.5                    # G1 * d == G1_HALF * (x3 + 1)
G2_HALF = G2 * 0.5
BETA_2_C_IN = BETA_2 * C_IN

LANE_BLOCK = 8 * 128                  # one dense (sublane, lane) tile = 1024 batch elems
MAX_TILE_LANES = 128 * 1024           # 128K lanes/tile -> ~8 MiB double-buffered VMEM
                                      # (safe under v5e's 16 MiB default scoped VMEM;
                                      #  go to 256K + vmem_limit_bytes on v6e/v7x if desired)


def building_kernel(x_ref, u_ref, o_ref):
    # x_ref: (4, TNB, 8, 128)  features = [temp, co2, T_amb, d_raw]
    # u_ref: (2, TNB, 8, 128)  features = [u1, u2]
    # o_ref: (2, TNB, 8, 128)  features = [temp_dot, co2_dot]   (zeros added outside)
    temp = x_ref[0].astype(jnp.float32)
    co2 = x_ref[1].astype(jnp.float32)
    t_amb = x_ref[2].astype(jnp.float32)
    x3p1 = x_ref[3].astype(jnp.float32) + 1.0        # 2*d
    u1 = u_ref[0].astype(jnp.float32)
    u2 = u_ref[1].astype(jnp.float32)

    temp_dot = (BETA_1 * (t_amb - temp)
                + BETA_1_PRIME * (u1 - temp * u2)
                + G1_HALF * x3p1)
    co2_dot = (BETA_2_C_IN - BETA_2 * co2) * u2 + G2_HALF * x3p1

    o_ref[0] = temp_dot.astype(o_ref.dtype)
    o_ref[1] = co2_dot.astype(o_ref.dtype)


def building_derivs_feature_major(x_fm, u_fm, max_tile_lanes=MAX_TILE_LANES):
    """Production path. x_fm: (4, B), u_fm: (2, B) -> (2, B) = [temp_dot, co2_dot].

    Batch is padded to a multiple of 1024 lanes only when needed (callers that
    keep B % 1024 == 0 pay zero extra HBM traffic), then viewed as dense
    (NB, 8, 128) vreg tiles.
    """
    c, b = x_fm.shape
    assert c == 4 and u_fm.shape == (2, b)
    dtype = x_fm.dtype

    b_pad = pl.cdiv(b, LANE_BLOCK) * LANE_BLOCK
    if b_pad != b:
        x_fm = jnp.pad(x_fm, ((0, 0), (0, b_pad - b)))
        u_fm = jnp.pad(u_fm, ((0, 0), (0, b_pad - b)))
    nb = b_pad // LANE_BLOCK

    # Contiguous (free) reshape: each feature row lands on dense (8,128) tiles.
    x4 = x_fm.reshape(4, nb, 8, 128)
    u2 = u_fm.reshape(2, nb, 8, 128)

    tile_nb = min(nb, max(1, max_tile_lanes // LANE_BLOCK))
    grid = (pl.cdiv(nb, tile_nb),)

    itemsize = jnp.dtype(dtype).itemsize
    cost = pl.CostEstimate(
        flops=12 * b_pad,
        transcendentals=0,
        bytes_accessed=(4 + 2 + 2) * b_pad * itemsize,  # 6 in rows + 2 out rows
    )

    out = pl.pallas_call(
        building_kernel,
        out_shape=jax.ShapeDtypeStruct((2, nb, 8, 128), dtype),
        grid=grid,
        in_specs=[
            pl.BlockSpec((4, tile_nb, 8, 128), lambda i: (0, i, 0, 0)),
            pl.BlockSpec((2, tile_nb, 8, 128), lambda i: (0, i, 0, 0)),
        ],
        out_specs=pl.BlockSpec((2, tile_nb, 8, 128), lambda i: (0, i, 0, 0)),
        compiler_params=pltpu.CompilerParams(
            dimension_semantics=("parallel",)),   # shards batch tiles across v7x TCs
        cost_estimate=cost,
    )(x4, u2)

    return out.reshape(2, b_pad)[:, :b]


def building_forward_feature_major(x_fm, u_fm, max_tile_lanes=MAX_TILE_LANES):
    """Feature-major, full-semantics path: (4, B), (2, B) -> (4, B) with zero rows 2-3.

    The zero rows are attached outside the kernel so they can fuse into
    consumers instead of being written to HBM by the kernel.
    """
    live = building_derivs_feature_major(x_fm, u_fm, max_tile_lanes)
    return jnp.concatenate([live, jnp.zeros_like(live)], axis=0)


def building_forward(x, u):
    """PyTorch-interface shim: x (B, 4), u (B, 2) -> (B, 4).

    The boundary transposes exist only to match the batch-major signature; jit
    this together with producers/consumers so XLA fuses them, or keep callers
    on the feature-major path and skip them entirely.
    """
    return building_forward_feature_major(x.T, u.T).T


def building_forward_ref(x, u):
    """Plain-JAX reference mirroring the PyTorch math exactly."""
    temp = x[:, 0:1]
    co2 = x[:, 1:2]
    t_amb = x[:, 2:3]
    d = (x[:, 3:4] + 1.0) / 2.0
    u1 = u[:, 0:1]
    u2 = u[:, 1:2]
    temp_dot = (-BETA_1 * temp + BETA_1_PRIME * u1 - BETA_1_PRIME * temp * u2
                + BETA_1 * t_amb + G1 * d)
    co2_dot = BETA_2 * (C_IN - co2) * u2 + G2 * d
    z = jnp.zeros_like(temp)
    return jnp.concatenate([temp_dot, co2_dot, z, z], axis=1)


if __name__ == "__main__":
    # --- small batch, PyTorch-style (B, C) interface -------------------------
    kx, ku = jax.random.split(jax.random.PRNGKey(0))
    B = 8
    x = jax.random.normal(kx, (B, 4), dtype=jnp.float32)
    u = jax.random.normal(ku, (B, 2), dtype=jnp.float32)

    out = jax.block_until_ready(jax.jit(building_forward)(x, u))
    ref = building_forward_ref(x, u)
    assert out.shape == (B, 4)
    assert jnp.allclose(out, ref, atol=1e-6, rtol=1e-6), "mismatch vs reference"

    # --- larger, non-divisible batch; feature-major path; multi-tile grid ----
    kx2, ku2 = jax.random.split(jax.random.PRNGKey(1))
    B2 = 5000                                    # pads to 5120 lanes -> nb = 5
    x2_fm = jax.random.normal(kx2, (4, B2), dtype=jnp.float32)
    u2_fm = jax.random.normal(ku2, (2, B2), dtype=jnp.float32)

    out2_fm = jax.block_until_ready(
        building_forward_feature_major(x2_fm, u2_fm, max_tile_lanes=2048))
    ref2 = building_forward_ref(x2_fm.T, u2_fm.T)
    assert out2_fm.shape == (4, B2)
    assert jnp.allclose(out2_fm.T, ref2, atol=1e-6, rtol=1e-6), \
        "tiled-path mismatch vs reference"

    print("KERNEL_OK")
</pallas_src>

<mosaic_0001>
module attributes {stable_mosaic.version = 11 : i64} {
  func.func @building_kernel(%arg0: i32, %arg1: memref<4x1x8x128xf32, #tpu.memory_space<vmem>>, %arg2: memref<2x1x8x128xf32, #tpu.memory_space<vmem>>, %arg3: memref<2x1x8x128xf32, #tpu.memory_space<vmem>>) attributes {dimension_semantics = [#tpu.dimension_semantics<parallel>], iteration_bounds = array<i64: 1>, scalar_prefetch = 0 : i64, scratch_operands = 0 : i64, tpu.core_type = #tpu.core_type<tc>, window_params = [{transform_indices = @transform_0, window_bounds = array<i64: 4, 1, 8, 128>}, {transform_indices = @transform_1, window_bounds = array<i64: 2, 1, 8, 128>}, {transform_indices = @transform_2, window_bounds = array<i64: 2, 1, 8, 128>}]} {
    %c0 = arith.constant 0 : index
    %c0_0 = arith.constant 0 : index
    %c0_1 = arith.constant 0 : index
    %c0_2 = arith.constant 0 : index
    %0 = vector.load %arg1[%c0, %c0_0, %c0_1, %c0_2] : memref<4x1x8x128xf32, #tpu.memory_space<vmem>>, vector<1x1x8x128xf32>
    %1 = vector.shape_cast %0 : vector<1x1x8x128xf32> to vector<1x8x128xf32>
    %c1 = arith.constant 1 : index
    %c0_3 = arith.constant 0 : index
    %c0_4 = arith.constant 0 : index
    %c0_5 = arith.constant 0 : index
    %2 = vector.load %arg1[%c1, %c0_3, %c0_4, %c0_5] : memref<4x1x8x128xf32, #tpu.memory_space<vmem>>, vector<1x1x8x128xf32>
    %3 = vector.shape_cast %2 : vector<1x1x8x128xf32> to vector<1x8x128xf32>
    %c2 = arith.constant 2 : index
    %c0_6 = arith.constant 0 : index
    %c0_7 = arith.constant 0 : index
    %c0_8 = arith.constant 0 : index
    %4 = vector.load %arg1[%c2, %c0_6, %c0_7, %c0_8] : memref<4x1x8x128xf32, #tpu.memory_space<vmem>>, vector<1x1x8x128xf32>
    %5 = vector.shape_cast %4 : vector<1x1x8x128xf32> to vector<1x8x128xf32>
    %c3 = arith.constant 3 : index
    %c0_9 = arith.constant 0 : index
    %c0_10 = arith.constant 0 : index
    %c0_11 = arith.constant 0 : index
    %6 = vector.load %arg1[%c3, %c0_9, %c0_10, %c0_11] : memref<4x1x8x128xf32, #tpu.memory_space<vmem>>, vector<1x1x8x128xf32>
    %7 = vector.shape_cast %6 : vector<1x1x8x128xf32> to vector<1x8x128xf32>
    %cst = arith.constant 1.000000e+00 : f32
    %8 = vector.broadcast %cst : f32 to vector<1x8x128xf32>
    %9 = arith.addf %7, %8 : vector<1x8x128xf32>
    %c0_12 = arith.constant 0 : index
    %c0_13 = arith.constant 0 : index
    %c0_14 = arith.constant 0 : index
    %c0_15 = arith.constant 0 : index
    %10 = vector.load %arg2[%c0_12, %c0_13, %c0_14, %c0_15] : memref<2x1x8x128xf32, #tpu.memory_space<vmem>>, vector<1x1x8x128xf32>
    %11 = vector.shape_cast %10 : vector<1x1x8x128xf32> to vector<1x8x128xf32>
    %c1_16 = arith.constant 1 : index
    %c0_17 = arith.constant 0 : index
    %c0_18 = arith.constant 0 : index
    %c0_19 = arith.constant 0 : index
    %12 = vector.load %arg2[%c1_16, %c0_17, %c0_18, %c0_19] : memref<2x1x8x128xf32, #tpu.memory_space<vmem>>, vector<1x1x8x128xf32>
    %13 = vector.shape_cast %12 : vector<1x1x8x128xf32> to vector<1x8x128xf32>
    %14 = arith.subf %5, %1 : vector<1x8x128xf32>
    %cst_20 = arith.constant 0.0150375944 : f32
    %15 = vector.broadcast %cst_20 : f32 to vector<1x8x128xf32>
    %16 = arith.mulf %15, %14 : vector<1x8x128xf32>
    %17 = arith.mulf %1, %13 : vector<1x8x128xf32>
    %18 = arith.subf %11, %17 : vector<1x8x128xf32>
    %cst_21 = arith.constant 7.51879707E-4 : f32
    %19 = vector.broadcast %cst_21 : f32 to vector<1x8x128xf32>
    %20 = arith.mulf %19, %18 : vector<1x8x128xf32>
    %21 = arith.addf %16, %20 : vector<1x8x128xf32>
    %cst_22 = arith.constant 2.500000e-04 : f32
    %22 = vector.broadcast %cst_22 : f32 to vector<1x8x128xf32>
    %23 = arith.mulf %22, %9 : vector<1x8x128xf32>
    %24 = arith.addf %21, %23 : vector<1x8x128xf32>
    %cst_23 = arith.constant 7.51879707E-4 : f32
    %25 = vector.broadcast %cst_23 : f32 to vector<1x8x128xf32>
    %26 = arith.mulf %25, %3 : vector<1x8x128xf32>
    %cst_24 = arith.constant -7.51879707E-4 : f32
    %27 = vector.broadcast %cst_24 : f32 to vector<1x8x128xf32>
    %28 = arith.subf %27, %26 : vector<1x8x128xf32>
    %29 = arith.mulf %28, %13 : vector<1x8x128xf32>
    %cst_25 = arith.constant 1.000000e-01 : f32
    %30 = vector.broadcast %cst_25 : f32 to vector<1x8x128xf32>
    %31 = arith.mulf %30, %9 : vector<1x8x128xf32>
    %32 = arith.addf %29, %31 : vector<1x8x128xf32>
    %c0_26 = arith.constant 0 : index
    %c0_27 = arith.constant 0 : index
    %c0_28 = arith.constant 0 : index
    %c0_29 = arith.constant 0 : index
    %33 = vector.load %arg3[%c0_26, %c0_27, %c0_28, %c0_29] : memref<2x1x8x128xf32, #tpu.memory_space<vmem>>, vector<1x1x8x128xf32>
    %34 = vector.shape_cast %33 : vector<1x1x8x128xf32> to vector<1x8x128xf32>
    %35 = vector.shape_cast %24 : vector<1x8x128xf32> to vector<1x1x8x128xf32>
    tpu.vector_store %arg3[%c0_26, %c0_27, %c0_28, %c0_29], %35 {strides = array<i32>} : memref<2x1x8x128xf32, #tpu.memory_space<vmem>>, vector<1x1x8x128xf32>,
    %c1_30 = arith.constant 1 : index
    %c0_31 = arith.constant 0 : index
    %c0_32 = arith.constant 0 : index
    %c0_33 = arith.constant 0 : index
    %36 = vector.load %arg3[%c1_30, %c0_31, %c0_32, %c0_33] : memref<2x1x8x128xf32, #tpu.memory_space<vmem>>, vector<1x1x8x128xf32>
    %37 = vector.shape_cast %36 : vector<1x1x8x128xf32> to vector<1x8x128xf32>
    %38 = vector.shape_cast %32 : vector<1x8x128xf32> to vector<1x1x8x128xf32>
    tpu.vector_store %arg3[%c1_30, %c0_31, %c0_32, %c0_33], %38 {strides = array<i32>} : memref<2x1x8x128xf32, #tpu.memory_space<vmem>>, vector<1x1x8x128xf32>,
    return
  }
  func.func @transform_0(%arg0: i32) -> (i32, i32, i32, i32) {
    %c0_i32 = arith.constant 0 : i32
    %c0_i32_0 = arith.constant 0 : i32
    %c0_i32_1 = arith.constant 0 : i32
    %c0_i32_2 = arith.constant 0 : i32
    return %c0_i32, %arg0, %c0_i32_0, %c0_i32_1 : i32, i32, i32, i32
  }
  func.func @transform_1(%arg0: i32) -> (i32, i32, i32, i32) {
    %c0_i32 = arith.constant 0 : i32
    %c0_i32_0 = arith.constant 0 : i32
    %c0_i32_1 = arith.constant 0 : i32
    %c0_i32_2 = arith.constant 0 : i32
    return %c0_i32, %arg0, %c0_i32_0, %c0_i32_1 : i32, i32, i32, i32
  }
  func.func @transform_2(%arg0: i32) -> (i32, i32, i32, i32) {
    %c0_i32 = arith.constant 0 : i32
    %c0_i32_0 = arith.constant 0 : i32
    %c0_i32_1 = arith.constant 0 : i32
    %c0_i32_2 = arith.constant 0 : i32
    return %c0_i32, %arg0, %c0_i32_0, %c0_i32_1 : i32, i32, i32, i32
  }
}

</mosaic_0001>

<llo_original>
// kernel: building_forward.1
$region0: #{building_forward.1}
  #allocation0 [shape = 'u32[]', space=smem, size = 0x4, offset = 0x4, fixed_abs, tag = 'smem constant byte address 0x4 - core index']
  #allocation1 [shape = 'u32[144,128]{1,0:T(1,128)}', space=vmem, size = 0x12000, scoped, tag = 'internal scratch']
  %s0 = inlined_call_operand.vmem [shape: f32[4,1,8,128], index: 0, kind: input, shape index: {}]
  %s1 = inlined_call_operand.vmem [shape: f32[2,1,8,128], index: 1, kind: input, shape index: {}]
  %s2 = inlined_call_operand.vmem [shape: f32[2,1,8,128], index: 2, kind: output, shape index: {}]
  %s3 = sld [smem:[#allocation0]]
  $region18: #{building_forward.1} parent=0
    _
  %s5 = ssub.s32 1, %s3
  %s6 = scalar_select 0, %s5, %s3
  // Predicated region
  $region2: #{building_forward.1} parent=0 // pred_check
    _
  $region3: #{building_forward.1} parent=0 // pred_check_branch
    %8 = sbr.rel (0) target = $region5
  $region4: #{building_forward.1} parent=0 // pred_region
    _
  $region5: #{building_forward.1} parent=0 // pred_fallthru
    _
  // Predicated region
  $region6: #{building_forward.1} parent=0 // pred_check
    _
  $region7: #{building_forward.1} parent=0 // pred_check_branch
    %10 = sbr.rel (0) target = $region9
  $region8: #{building_forward.1} parent=0 // pred_region
    _
  $region9: #{building_forward.1} parent=0 // pred_fallthru
    _
  %v11 = vld [vmem:[%s0] sm:$0xff]
  %s12 = scalar_lea.vmem %s0, 8
  %v13 = vld [vmem:[%s12] sm:$0xff]
  %s14 = scalar_lea.vmem %s0, 16
  %v15 = vld [vmem:[%s14] sm:$0xff]
  %s16 = scalar_lea.vmem %s0, 24
  %v17 = vld [vmem:[%s16] sm:$0xff]
  %v18 = vadd.f32 %v17, 1.0
  %v19 = vld [vmem:[%s1] sm:$0xff]
  %s20 = scalar_lea.vmem %s1, 8
  %v21 = vld [vmem:[%s20] sm:$0xff]
  %v22 = vsub.f32 %v15, %v11
  %v23 = vmul.f32 %v22, 0.015037594
  %v24 = vmul.f32 %v11, %v21
  %v25 = vsub.f32 %v19, %v24
  %v26 = vmul.f32 %v25, 0.0007518797
  %v27 = vadd.f32 %v23, %v26
  %v28 = vmul.f32 %v18, 0.00025
  %v29 = vadd.f32 %v27, %v28
  %v30 = vmul.f32 %v13, 0.0007518797
  %v31 = vsub.f32 -0.0007518797, %v30
  %v32 = vmul.f32 %v31, %v21
  %v33 = vmul.f32 %v18, 0.1
  %v34 = vadd.f32 %v32, %v33
  %35 = vst [vmem:[%s2] sm:$0xff] %v29
  %s36 = scalar_lea.vmem %s2, 8
  %37 = vst [vmem:[%s36] sm:$0xff] %v34
  // Predicated region
  $region10: #{building_forward.1} parent=0 // pred_check
    _
  $region11: #{building_forward.1} parent=0 // pred_check_branch
    %39 = sbr.rel (0) target = $region13
  $region12: #{building_forward.1} parent=0 // pred_region
    _
  $region13: #{building_forward.1} parent=0 // pred_fallthru
    _
  // Predicated region
  $region14: #{building_forward.1} parent=0 // pred_check
    _
  $region15: #{building_forward.1} parent=0 // pred_check_branch
    %41 = sbr.rel (0) target = $region17
  $region16: #{building_forward.1} parent=0 // pred_region
    _
  $region17: #{building_forward.1} parent=0 // pred_fallthru
    _

</llo_original>
